<compile_context>
chip_gen: v5e
topology: v5e:2x2
jax: 0.10.0
libtpu: 0.0.40
codegen_flags: <defaults>
</compile_context>

<pallas_src>
import functools

import jax
import jax.numpy as jnp
from jax.experimental import pallas as pl
from jax.experimental.pallas import tpu as pltpu


def _round_up(v, m):
    return (v + m - 1) // m * m


def _default_act_dtype():
    """bf16 activations on TPU generations with a bf16 VPU/EUP (v6e / v7x); f32 otherwise (v5e)."""
    try:
        kind = jax.devices()[0].device_kind.lower()
    except Exception:
        return jnp.float32
    if "v6" in kind or "v7" in kind:
        return jnp.bfloat16
    return jnp.float32


def _mlp_kernel(x_ref, w1_ref, b1_ref, w2_ref, b2_ref, out_ref, *, d_in, act_dtype):
    """One row-tile of: out = sigmoid(x @ W1 + b1) @ W2 + b2."""
    x = x_ref[...]                                       # (tile_n, d_in) f32

    # ---- layer 1: x @ W1 + b1 ----
    if d_in == 1:
        # K=1 contraction is an outer product: keep it on the VPU (broadcast multiply);
        # a 1-deep MXU pass would be pure waste.
        pre = x * w1_ref[...]                            # (tile_n,1)*(1,H) -> (tile_n,H)
    else:
        pre = jnp.dot(x, w1_ref[...], preferred_element_type=jnp.float32)
    pre = pre + b1_ref[...]                              # (1, H) broadcast, f32

    # ---- sigmoid as a single EUP op: sigmoid(z) = 0.5*tanh(0.5*z) + 0.5 (exact) ----
    # Activations run in act_dtype: bf16 on v6e/v7x (2x vreg packing on the binding
    # EUP/VALU path), f32 on v5e (no bf16 VPU/EUP there).
    z = (0.5 * pre).astype(act_dtype)
    h = 0.5 * jnp.tanh(z) + 0.5                          # (tile_n, H), act_dtype

    # ---- layer 2 on the MXU: K = H is full-width even when d_out == 1, and the MXU
    # slot is otherwise idle, so this reduction is free filler (replaces the old
    # cross-lane XLU sum).  w2_ref was pre-cast to act_dtype by the wrapper.
    o = jnp.dot(h, w2_ref[...], preferred_element_type=jnp.float32)
    out_ref[...] = (o + b2_ref[...]).astype(out_ref.dtype)


@functools.partial(jax.jit, static_argnames=("tile_n", "act_dtype", "force_kernel"))
def net_forward(x, w1, b1, w2, b2, *, tile_n=None, act_dtype=jnp.float32, force_kernel=False):
    """sigmoid(x @ w1 + b1) @ w2 + b2.

    x: (N, D_in), w1: (D_in, H), b1: (1, H), w2: (H, D_out), b2: (1, D_out).
    """
    n, d_in = x.shape
    hidden = w1.shape[1]
    d_out = w2.shape[1]

    # Small-problem fast path: at tiny sizes custom-call launch overhead dominates and
    # fused XLA is strictly faster.  The demo forces the kernel path explicitly.
    if not force_kernel and n * hidden <= 8192:
        return jax.nn.sigmoid(x @ w1 + b1) @ w2 + b2

    # Row tile: sublane-aligned; one tile covers the whole batch for small/medium N
    # (no near-empty grid steps).  For N > 512 the grid has >= 2 steps, so the
    # "parallel" batch axis actually shards across both TensorCores on v7x.
    if tile_n is None:
        tile_n = min(_round_up(max(n, 8), 8), 512)

    # Pad only when the batch is smaller than a single tile (trivially cheap).  For
    # N >= tile_n we never copy x: grid = cdiv(N, tile_n) and Pallas masks the ragged
    # last tile's output stores (garbage rows from the OOB input read never land).
    num_rows = n
    if n < tile_n:
        x = jnp.pad(x, ((0, tile_n - n), (0, 0)))
        num_rows = tile_n

    # Match the layer-2 MXU input dtype to the activation dtype (bf16 on v6e/v7x).
    w2_k = w2.astype(act_dtype)

    kernel = functools.partial(_mlp_kernel, d_in=d_in, act_dtype=act_dtype)
    vmem = pltpu.MemorySpace.VMEM

    out = pl.pallas_call(
        kernel,
        out_shape=jax.ShapeDtypeStruct((num_rows, d_out), jnp.float32),
        grid=(pl.cdiv(num_rows, tile_n),),
        in_specs=[
            # Only x is tiled over the grid; parameters use constant index_maps so they
            # are loaded once and stay VMEM-resident across all grid steps (tiny here:
            # well under the 32 MiB scoped / 64 MiB physical VMEM budget on v7x).
            pl.BlockSpec((tile_n, d_in), lambda i: (i, 0), memory_space=vmem),
            pl.BlockSpec(w1.shape, lambda i: (0, 0), memory_space=vmem),
            pl.BlockSpec(b1.shape, lambda i: (0, 0), memory_space=vmem),
            pl.BlockSpec(w2_k.shape, lambda i: (0, 0), memory_space=vmem),
            pl.BlockSpec(b2.shape, lambda i: (0, 0), memory_space=vmem),
        ],
        out_specs=pl.BlockSpec((tile_n, d_out), lambda i: (i, 0), memory_space=vmem),
        compiler_params=pltpu.CompilerParams(
            # Batch tiles are independent -> megacore sharding on v7x.
            dimension_semantics=("parallel",),
        ),
    )(x, w1, b1, w2_k, b2)

    return out[:n] if num_rows != n else out


def make_params(key, input_dim, hidden_dim, output_dim):
    """Deterministic init mimicking torch.nn.Linear (uniform +/- 1/sqrt(fan_in))."""
    k1, k2, k3, k4 = jax.random.split(key, 4)
    bound1 = 1.0 / jnp.sqrt(jnp.float32(input_dim))
    bound2 = 1.0 / jnp.sqrt(jnp.float32(hidden_dim))
    w1 = jax.random.uniform(k1, (input_dim, hidden_dim), jnp.float32, -bound1, bound1)
    b1 = jax.random.uniform(k2, (1, hidden_dim), jnp.float32, -bound1, bound1)
    w2 = jax.random.uniform(k3, (hidden_dim, output_dim), jnp.float32, -bound2, bound2)
    b2 = jax.random.uniform(k4, (1, output_dim), jnp.float32, -bound2, bound2)
    return w1, b1, w2, b2


if __name__ == "__main__":
    key = jax.random.PRNGKey(0)
    k_x, k_p, k_x2 = jax.random.split(key, 3)

    # Shapes implied by the module: ndata=10, input_dim=1, output_dim=1 (target y is
    # (ndata, 1)).  hidden_dim is a free hyperparameter; 128 keeps the hidden
    # activations lane-dense (one full vreg lane row).
    ndata, input_dim, hidden_dim, output_dim = 10, 1, 128, 1
    x = jax.random.normal(k_x, (ndata, input_dim), jnp.float32)
    w1, b1, w2, b2 = make_params(k_p, input_dim, hidden_dim, output_dim)

    act_dtype = _default_act_dtype()

    def run(xv, **kw):
        # Defensive: if the bf16 activation path ever fails to lower on this chip,
        # fall back to the exact f32 path instead of crashing.
        try:
            return net_forward(xv, w1, b1, w2, b2, act_dtype=act_dtype, **kw), act_dtype
        except Exception:
            if act_dtype == jnp.float32:
                raise
            return net_forward(xv, w1, b1, w2, b2, act_dtype=jnp.float32, **kw), jnp.float32

    def ref_fwd(xv):
        return jax.nn.sigmoid(xv @ w1 + b1) @ w2 + b2

    def check(out, xv, used_dtype):
        ref = ref_fwd(xv)
        tol = 3e-2 if used_dtype == jnp.bfloat16 else 5e-3
        assert out.shape == ref.shape
        assert jnp.allclose(out, ref, atol=tol, rtol=tol), float(jnp.max(jnp.abs(out - ref)))

    # 1) Spec-sized problem (N=10): force the kernel path (the dispatcher would
    #    otherwise route something this tiny to plain fused XLA).
    out, used = run(x, force_kernel=True)
    jax.block_until_ready(out)
    check(out, x, used)

    # 2) Multi-tile / ragged-tail path (still tiny data): 300 rows with 128-row tiles
    #    -> 3 grid steps, last one ragged; exercises the no-pad boundary handling.
    x2 = jax.random.normal(k_x2, (300, input_dim), jnp.float32)
    out2, used2 = run(x2, tile_n=128)
    jax.block_until_ready(out2)
    check(out2, x2, used2)

    print("KERNEL_OK")
</pallas_src>

<mosaic_0001>
module attributes {stable_mosaic.version = 11 : i64} {
  func.func @_mlp_kernel(%arg0: i32, %arg1: memref<16x1xf32, #tpu.memory_space<vmem>>, %arg2: memref<1x128xf32, #tpu.memory_space<vmem>>, %arg3: memref<1x128xf32, #tpu.memory_space<vmem>>, %arg4: memref<128x1xf32, #tpu.memory_space<vmem>>, %arg5: memref<1x1xf32, #tpu.memory_space<vmem>>, %arg6: memref<16x1xf32, #tpu.memory_space<vmem>>) attributes {dimension_semantics = [#tpu.dimension_semantics<parallel>], iteration_bounds = array<i64: 1>, scalar_prefetch = 0 : i64, scratch_operands = 0 : i64, tpu.core_type = #tpu.core_type<tc>, window_params = [{transform_indices = @transform_0, window_bounds = array<i64: 16, 1>}, {pipeline_mode = #tpu.pipeline_mode<synchronous>, transform_indices = @transform_1, window_bounds = array<i64: 1, 128>}, {pipeline_mode = #tpu.pipeline_mode<synchronous>, transform_indices = @transform_2, window_bounds = array<i64: 1, 128>}, {pipeline_mode = #tpu.pipeline_mode<synchronous>, transform_indices = @transform_3, window_bounds = array<i64: 128, 1>}, {pipeline_mode = #tpu.pipeline_mode<synchronous>, transform_indices = @transform_4, window_bounds = array<i64: 1, 1>}, {transform_indices = @transform_5, window_bounds = array<i64: 16, 1>}]} {
    %c0 = arith.constant 0 : index
    %c0_0 = arith.constant 0 : index
    %0 = vector.load %arg1[%c0, %c0_0] : memref<16x1xf32, #tpu.memory_space<vmem>>, vector<16x1xf32>
    %c0_1 = arith.constant 0 : index
    %c0_2 = arith.constant 0 : index
    %1 = vector.load %arg2[%c0_1, %c0_2] : memref<1x128xf32, #tpu.memory_space<vmem>>, vector<1x128xf32>
    %2 = vector.broadcast %0 : vector<16x1xf32> to vector<16x128xf32>
    %3 = vector.broadcast %1 : vector<1x128xf32> to vector<16x128xf32>
    %4 = arith.mulf %2, %3 : vector<16x128xf32>
    %c0_3 = arith.constant 0 : index
    %c0_4 = arith.constant 0 : index
    %5 = vector.load %arg3[%c0_3, %c0_4] : memref<1x128xf32, #tpu.memory_space<vmem>>, vector<1x128xf32>
    %6 = vector.broadcast %5 : vector<1x128xf32> to vector<16x128xf32>
    %7 = arith.addf %4, %6 : vector<16x128xf32>
    %cst = arith.constant 5.000000e-01 : f32
    %8 = vector.broadcast %cst : f32 to vector<16x128xf32>
    %9 = arith.mulf %8, %7 : vector<16x128xf32>
    %10 = math.tanh %9 : vector<16x128xf32>
    %cst_5 = arith.constant 5.000000e-01 : f32
    %11 = vector.broadcast %cst_5 : f32 to vector<16x128xf32>
    %12 = arith.mulf %11, %10 : vector<16x128xf32>
    %cst_6 = arith.constant 5.000000e-01 : f32
    %13 = vector.broadcast %cst_6 : f32 to vector<16x128xf32>
    %14 = arith.addf %12, %13 : vector<16x128xf32>
    %c0_7 = arith.constant 0 : index
    %c0_8 = arith.constant 0 : index
    %15 = vector.load %arg4[%c0_7, %c0_8] : memref<128x1xf32, #tpu.memory_space<vmem>>, vector<128x1xf32>
    %cst_9 = arith.constant dense<0.000000e+00> : vector<16x1xf32>
    %16 = tpu.matmul %14, %15, %cst_9 {dimension_numbers = #tpu.dot_dimension_numbers<[1], [0], [0], [1], [0, 0, 1, 1], [], []>} : vector<16x128xf32>, vector<128x1xf32>, vector<16x1xf32> -> vector<16x1xf32>
    %c0_10 = arith.constant 0 : index
    %c0_11 = arith.constant 0 : index
    %17 = vector.load %arg5[%c0_10, %c0_11] : memref<1x1xf32, #tpu.memory_space<vmem>>, vector<1x1xf32>
    %18 = vector.broadcast %17 : vector<1x1xf32> to vector<16x1xf32>
    %19 = arith.addf %16, %18 : vector<16x1xf32>
    %c0_12 = arith.constant 0 : index
    %c0_13 = arith.constant 0 : index
    %20 = vector.load %arg6[%c0_12, %c0_13] : memref<16x1xf32, #tpu.memory_space<vmem>>, vector<16x1xf32>
    tpu.vector_store %arg6[%c0_12, %c0_13], %19 {strides = array<i32>} : memref<16x1xf32, #tpu.memory_space<vmem>>, vector<16x1xf32>,
    return
  }
  func.func @transform_0(%arg0: i32) -> (i32, i32) {
    %c0_i32 = arith.constant 0 : i32
    %c0_i32_0 = arith.constant 0 : i32
    return %arg0, %c0_i32 : i32, i32
  }
  func.func @transform_1(%arg0: i32) -> (i32, i32) {
    %c0_i32 = arith.constant 0 : i32
    %c0_i32_0 = arith.constant 0 : i32
    %c0_i32_1 = arith.constant 0 : i32
    return %c0_i32, %c0_i32_0 : i32, i32
  }
  func.func @transform_2(%arg0: i32) -> (i32, i32) {
    %c0_i32 = arith.constant 0 : i32
    %c0_i32_0 = arith.constant 0 : i32
    %c0_i32_1 = arith.constant 0 : i32
    return %c0_i32, %c0_i32_0 : i32, i32
  }
  func.func @transform_3(%arg0: i32) -> (i32, i32) {
    %c0_i32 = arith.constant 0 : i32
    %c0_i32_0 = arith.constant 0 : i32
    %c0_i32_1 = arith.constant 0 : i32
    return %c0_i32, %c0_i32_0 : i32, i32
  }
  func.func @transform_4(%arg0: i32) -> (i32, i32) {
    %c0_i32 = arith.constant 0 : i32
    %c0_i32_0 = arith.constant 0 : i32
    %c0_i32_1 = arith.constant 0 : i32
    return %c0_i32, %c0_i32_0 : i32, i32
  }
  func.func @transform_5(%arg0: i32) -> (i32, i32) {
    %c0_i32 = arith.constant 0 : i32
    %c0_i32_0 = arith.constant 0 : i32
    return %arg0, %c0_i32 : i32, i32
  }
}

</mosaic_0001>

<llo_original>
// kernel: net_forward.1
$region0: #{net_forward.1}
  #allocation0 [shape = 'u32[]', space=smem, size = 0x4, offset = 0x4, fixed_abs, tag = 'smem constant byte address 0x4 - core index']
  #allocation1 [shape = 'u32[72,128]{1,0:T(1,128)}', space=vmem, size = 0x9000, scoped, tag = 'internal scratch']
  #allocation2 [shape = 'f32[1,1]{1,0:T(1,128)S(1)}', space=vmem, size = 0x200, scoped, tag = 'scoped memory for net_forward.1']
  %s0 = inlined_call_operand.vmem [shape: f32[16,1], index: 0, kind: input, shape index: {}]
  %s1 = inlined_call_operand.vmem [shape: f32[1,128], index: 1, kind: input, shape index: {}]
  %s2 = inlined_call_operand.vmem [shape: f32[1,128], index: 2, kind: input, shape index: {}]
  %s3 = inlined_call_operand.vmem [shape: f32[128,1], index: 3, kind: input, shape index: {}]
  %s4 = inlined_call_operand.<no memory space> [shape: f32[1,1], index: 4, kind: input, shape index: {}]
  %s5 = inlined_call_operand.vmem [shape: f32[16,1], index: 5, kind: output, shape index: {}]
  %s6 = sld [smem:[#allocation0]]
  $region30: #{net_forward.1} parent=0
    _
  %s8 = ssub.s32 1, %s6
  %s9 = scalar_select 0, %s8, %s6
  %v10 = vstv %s4
  %11 = vst [vmem:[#allocation2] sm:$0x1] %v10
  // Predicated region
  $region2: #{net_forward.1} parent=0 // pred_check
    _
  $region3: #{net_forward.1} parent=0 // pred_check_branch
    %13 = sbr.rel (0) target = $region5
  $region4: #{net_forward.1} parent=0 // pred_region
    _
  $region5: #{net_forward.1} parent=0 // pred_fallthru
    _
  // Predicated region
  $region6: #{net_forward.1} parent=0 // pred_check
    _
  $region7: #{net_forward.1} parent=0 // pred_check_branch
    %15 = sbr.rel (0) target = $region9
  $region8: #{net_forward.1} parent=0 // pred_region
    _
  $region9: #{net_forward.1} parent=0 // pred_fallthru
    _
  // Predicated region
  $region10: #{net_forward.1} parent=0 // pred_check
    _
  $region11: #{net_forward.1} parent=0 // pred_check_branch
    %17 = sbr.rel (0) target = $region13
  $region12: #{net_forward.1} parent=0 // pred_region
    _
  $region13: #{net_forward.1} parent=0 // pred_fallthru
    _
  // Predicated region
  $region14: #{net_forward.1} parent=0 // pred_check
    _
  $region15: #{net_forward.1} parent=0 // pred_check_branch
    %19 = sbr.rel (0) target = $region17
  $region16: #{net_forward.1} parent=0 // pred_region
    _
  $region17: #{net_forward.1} parent=0 // pred_fallthru
    _
  // Predicated region
  $region18: #{net_forward.1} parent=0 // pred_check
    _
  $region19: #{net_forward.1} parent=0 // pred_check_branch
    %21 = sbr.rel (0) target = $region21
  $region20: #{net_forward.1} parent=0 // pred_region
    _
  $region21: #{net_forward.1} parent=0 // pred_fallthru
    _
  %v22 = vld [vmem:[%s0] sm:$0xff]
  %v23 = vld [vmem:[%s0 + $0x8] sm:$0xff]
  %v24 = vld [vmem:[%s1] sm:$0x1]
  %26 = vset.pattern.permute.xlu0 0
  %27 = vperm.xlu0 %26, %v22
  %v28 = vpop.permute.xlu0 %27
  %31 = vset.pattern.permute.xlu0 0
  %32 = vperm.xlu0 %31, %v23
  %v33 = vpop.permute.xlu0 %32
  %v36 = vperm.slane %v24, 0
  %v38 = vmul.f32 %v28, %v36
  %v39 = vmul.f32 %v33, %v36
  %v40 = vld [vmem:[%s2] sm:$0x1]
  %v42 = vperm.slane %v40, 0
  %v44 = vadd.f32 %v38, %v42
  %v45 = vadd.f32 %v39, %v42
  %v46 = vmul.f32 %v44, 0.5
  %v47 = vmul.f32 %v45, 0.5
  %v48 = vtanh.pop %v46
  %v49 = vtanh.pop %v47
  %v50 = vmul.f32 %v48, 0.5
  %v51 = vmul.f32 %v49, 0.5
  %v52 = vadd.f32 %v50, 0.5
  %v53 = vadd.f32 %v51, 0.5
  %v54 = vld [vmem:[%s3] sm:$0xff]
  %v55 = vld [vmem:[%s3 + $0x8] sm:$0xff]
  %v56 = vld [vmem:[%s3 + $0x10] sm:$0xff]
  %v57 = vld [vmem:[%s3 + $0x18] sm:$0xff]
  %v58 = vld [vmem:[%s3 + $0x20] sm:$0xff]
  %v59 = vld [vmem:[%s3 + $0x28] sm:$0xff]
  %v60 = vld [vmem:[%s3 + $0x30] sm:$0xff]
  %v61 = vld [vmem:[%s3 + $0x38] sm:$0xff]
  %v62 = vld [vmem:[%s3 + $0x40] sm:$0xff]
  %v63 = vld [vmem:[%s3 + $0x48] sm:$0xff]
  %v64 = vld [vmem:[%s3 + $0x50] sm:$0xff]
  %v65 = vld [vmem:[%s3 + $0x58] sm:$0xff]
  %v66 = vld [vmem:[%s3 + $0x60] sm:$0xff]
  %v67 = vld [vmem:[%s3 + $0x68] sm:$0xff]
  %v68 = vld [vmem:[%s3 + $0x70] sm:$0xff]
  %v69 = vld [vmem:[%s3 + $0x78] sm:$0xff]
  %v70 = vld [vmem:[#allocation2] sm:$0x1]
  %v72 = vperm.slane %v70, 0
  %74 = vmatpush.msra.mxu0 %v69
  %75 = vmatpush.msra.mxu0 %v68
  %76 = vmatpush.msra.mxu0 %v67
  %77 = vmatpush.msra.mxu0 %v66
  %78 = vmatpush.msra.mxu0 %v65
  %79 = vmatpush.msra.mxu0 %v64
  %80 = vmatpush.msra.mxu0 %v63
  %81 = vmatpush.msra.mxu0 %v62
  %82 = vmatpush.msra.mxu0 %v61
  %83 = vmatpush.msra.mxu0 %v60
  %84 = vmatpush.msra.mxu0 %v59
  %85 = vmatpush.msra.mxu0 %v58
  %86 = vmatpush.msra.mxu0 %v57
  %87 = vmatpush.msra.mxu0 %v56
  %88 = vmatpush.msra.mxu0 %v55
  %89 = vmatpush.msra.mxu0 %v54
  %90 = vmatmul.f32.gmra.mxu0 %v52
  %v91 = vpop.f32.mrf.mxu0
  %v92 = vadd.f32 %v72, %v91
  %93 = vmatmul.f32.gmra.mxu0 %v53
  %v94 = vpop.f32.mrf.mxu0
  %v95 = vadd.f32 %v72, %v94
  %96 = vdwg.mxu0
  %vm97 = vcmask 7168
  %98 = vst.msk [vmem:[%s5] sm:$0xff] %vm97, %v92
  %99 = vst.msk [vmem:[%s5 + $0x8] sm:$0xff] %vm97, %v95
  // Predicated region
  $region22: #{net_forward.1} parent=0 // pred_check
    _
  $region23: #{net_forward.1} parent=0 // pred_check_branch
    %101 = sbr.rel (0) target = $region25
  $region24: #{net_forward.1} parent=0 // pred_region
    _
  $region25: #{net_forward.1} parent=0 // pred_fallthru
    _
  // Predicated region
  $region26: #{net_forward.1} parent=0 // pred_check
    _
  $region27: #{net_forward.1} parent=0 // pred_check_branch
    %103 = sbr.rel (0) target = $region29
  $region28: #{net_forward.1} parent=0 // pred_region
    _
  $region29: #{net_forward.1} parent=0 // pred_fallthru
    _

</llo_original>
